<compile_context>
chip_gen: v5e
topology: v5e:2x2
jax: 0.10.0
libtpu: 0.0.40
codegen_flags: <defaults>
</compile_context>

<pallas_src>
import jax
import jax.numpy as jnp
from jax.experimental import pallas as pl
from jax.experimental.pallas import tpu as pltpu


NEG_SLOPE = 0.2        # LeakyReLU slope assumed for self.act
NEG_BIG = -1e30        # finite "-inf" so masked online-softmax never produces NaN


# ---------------------------------------------------------------------------
# Kernel 1: per-node attention scores  s = tanh(h @ [w_head | w_tail])  -> [N, 2]
# ---------------------------------------------------------------------------
def gat_scores_kernel(h_ref, w_ht_ref, s_ref):
    s_ref[...] = jnp.tanh(
        jnp.dot(h_ref[...], w_ht_ref[...], preferred_element_type=jnp.float32))


# ---------------------------------------------------------------------------
# Kernel 2: masked edge-softmax (online) + weighted aggregation + fc + L2 norm
#   grid = (dst row tiles [parallel], src k-tiles [arbitrary reduction])
# ---------------------------------------------------------------------------
def gat_attn_kernel(et_ref, eh_ref, adj_ref, h_ref, w_fc_ref, b_ref,
                    out_ref, m_sc, l_sc, acc_sc):
    k = pl.program_id(1)

    @pl.when(k == 0)
    def _init():
        m_sc[...] = jnp.full_like(m_sc, NEG_BIG)
        l_sc[...] = jnp.zeros_like(l_sc)
        acc_sc[...] = jnp.zeros_like(acc_sc)

    adj = adj_ref[...].astype(jnp.float32)            # [tm, tk] 0/1 mask (bf16 in HBM)
    mask = adj > 0.0

    # e[dst, src] = LeakyReLU(eh[src] + et[dst]);  et: [tm,1], eh: [1,tk]
    logits = et_ref[...] + eh_ref[...]                # [tm, tk]
    logits = jnp.where(logits >= 0.0, logits, NEG_SLOPE * logits)

    # --- masked online softmax over the src (lane) axis ---
    masked = jnp.where(mask, logits, NEG_BIG)
    m_prev = m_sc[...]
    m_new = jnp.maximum(m_prev, jnp.max(masked, axis=1, keepdims=True))
    alpha = jnp.exp(m_prev - m_new)
    p = jnp.where(mask, jnp.exp(logits - m_new), 0.0)  # [tm, tk] unnormalized weights

    l_sc[...] = alpha * l_sc[...] + jnp.sum(p, axis=1, keepdims=True)
    acc_sc[...] = alpha * acc_sc[...] + jnp.dot(
        p.astype(h_ref.dtype), h_ref[...], preferred_element_type=jnp.float32)
    m_sc[...] = m_new

    # --- epilogue: normalize softmax, fc, bias, L2 row-normalize ---
    @pl.when(k == pl.num_programs(1) - 1)
    def _finalize():
        l = l_sc[...]
        # zero in-degree rows (no edges at all) -> ft = 0 (demo adds self-loops)
        inv_l = jnp.where(l > 0.0, pl.reciprocal(l, approx=True), 0.0)
        ft = acc_sc[...] * inv_l                                    # [tm, F_in]
        z = jnp.dot(ft.astype(w_fc_ref.dtype), w_fc_ref[...],
                    preferred_element_type=jnp.float32) + b_ref[...]
        # F.normalize(p=2, dim=1): z / max(||z||, 1e-12)
        ssq = jnp.sum(z * z, axis=1, keepdims=True)
        inv_norm = jax.lax.rsqrt(jnp.maximum(ssq, 1e-24))
        out_ref[...] = (z * inv_norm).astype(out_ref.dtype)


# ---------------------------------------------------------------------------
# Wrapper
# ---------------------------------------------------------------------------
def gat_layer(adj, h, w_head, w_tail, w_fc, b_fc, *, block_m=128, block_k=128):
    n, f_in = h.shape
    f_out = w_fc.shape[1]
    assert adj.shape == (n, n)
    block_m = min(block_m, n)
    block_k = min(block_k, n)
    assert n % block_m == 0 and n % block_k == 0, "demo requires divisible tiles"

    # --- kernel 1: node scores (f32 inputs; tiny matmul) ---
    w_ht = jnp.concatenate(
        [w_head.reshape(f_in, 1), w_tail.reshape(f_in, 1)], axis=1).astype(jnp.float32)
    scores = pl.pallas_call(
        gat_scores_kernel,
        out_shape=jax.ShapeDtypeStruct((n, 2), jnp.float32),
        grid=(n // block_m,),
        in_specs=[
            pl.BlockSpec((block_m, f_in), lambda i: (i, 0)),
            pl.BlockSpec((f_in, 2), lambda i: (0, 0)),
        ],
        out_specs=pl.BlockSpec((block_m, 2), lambda i: (i, 0)),
        compiler_params=pltpu.CompilerParams(dimension_semantics=("parallel",)),
    )(h.astype(jnp.float32), w_ht)

    # layout plumbing (outside the kernels): eh as a lane-major row, et as a column
    eh_row = scores[:, 0].reshape(1, n)     # src scores
    et_col = scores[:, 1].reshape(n, 1)     # dst scores

    # --- kernel 2: attention + aggregation + fc + normalize ---
    adj_bf16 = adj.astype(jnp.bfloat16)     # 0/1 exact in bf16; halves O(N^2) traffic
    h_bf16 = h.astype(jnp.bfloat16)
    w_fc_bf16 = w_fc.astype(jnp.bfloat16)
    b2d = b_fc.reshape(1, f_out).astype(jnp.float32)

    grid = (n // block_m, n // block_k)
    return pl.pallas_call(
        gat_attn_kernel,
        out_shape=jax.ShapeDtypeStruct((n, f_out), jnp.float32),
        grid=grid,
        in_specs=[
            pl.BlockSpec((block_m, 1), lambda i, k: (i, 0)),        # et (dst column)
            pl.BlockSpec((1, block_k), lambda i, k: (0, k)),        # eh (src row)
            pl.BlockSpec((block_m, block_k), lambda i, k: (i, k)),  # adj tile
            pl.BlockSpec((block_k, f_in), lambda i, k: (k, 0)),     # h (src features)
            pl.BlockSpec((f_in, f_out), lambda i, k: (0, 0)),       # W_fc
            pl.BlockSpec((1, f_out), lambda i, k: (0, 0)),          # bias
        ],
        out_specs=pl.BlockSpec((block_m, f_out), lambda i, k: (i, 0)),
        scratch_shapes=[
            pltpu.VMEM((block_m, 1), jnp.float32),      # running max  m
            pltpu.VMEM((block_m, 1), jnp.float32),      # running sum  l
            pltpu.VMEM((block_m, f_in), jnp.float32),   # ft accumulator
        ],
        compiler_params=pltpu.CompilerParams(
            dimension_semantics=("parallel", "arbitrary")),
        # For large N, also set vmem_limit_bytes (e.g. 64-96 MiB on v6e) and shrink
        # block_m/block_k on v7x (64 MiB VMEM); default limits suffice at demo sizes.
    )(et_col, eh_row, adj_bf16, h_bf16, w_fc_bf16, b2d)


# ---------------------------------------------------------------------------
# Pure-JAX reference (f32)
# ---------------------------------------------------------------------------
def reference(adj, h, w_head, w_tail, w_fc, b_fc, neg_slope=NEG_SLOPE):
    eh = jnp.tanh(h @ w_head.reshape(-1, 1))            # [N, 1]
    et = jnp.tanh(h @ w_tail.reshape(-1, 1))            # [N, 1]
    logits = et + eh.T                                  # [dst, src]
    logits = jnp.where(logits >= 0, logits, neg_slope * logits)
    mask = adj > 0
    a = jax.nn.softmax(jnp.where(mask, logits, -jnp.inf), axis=1)
    a = jnp.where(mask, a, 0.0)
    ft = a @ h
    z = ft @ w_fc + b_fc[None, :]
    nrm = jnp.sqrt(jnp.sum(z * z, axis=1, keepdims=True))
    return z / jnp.maximum(nrm, 1e-12)


if __name__ == "__main__":
    N, F_IN, F_OUT = 256, 128, 128     # lane-aligned (128) features, 2x2 grid of tiles

    key = jax.random.PRNGKey(0)
    k_h, k_adj, k_wh, k_wt, k_wf, k_b = jax.random.split(key, 6)

    # node features
    h = jax.random.normal(k_h, (N, F_IN), dtype=jnp.float32)

    # random directed graph (adj[i, j] = edge j -> i); self-loops => every node has
    # at least one in-neighbor (zero in-degree nodes would aggregate to 0 here).
    adj = (jax.random.uniform(k_adj, (N, N)) < 0.1).astype(jnp.float32)
    adj = jnp.maximum(adj, jnp.eye(N, dtype=jnp.float32))

    # nn.Linear-style uniform init, bound = 1/sqrt(in_feats)
    bound = 1.0 / jnp.sqrt(jnp.float32(F_IN))
    w_head = jax.random.uniform(k_wh, (F_IN,), minval=-bound, maxval=bound, dtype=jnp.float32)
    w_tail = jax.random.uniform(k_wt, (F_IN,), minval=-bound, maxval=bound, dtype=jnp.float32)
    w_fc = jax.random.uniform(k_wf, (F_IN, F_OUT), minval=-bound, maxval=bound, dtype=jnp.float32)
    b_fc = jax.random.uniform(k_b, (F_OUT,), minval=-bound, maxval=bound, dtype=jnp.float32)

    out = gat_layer(adj, h, w_head, w_tail, w_fc, b_fc, block_m=128, block_k=128)
    out = jax.block_until_ready(out)

    ref = reference(adj, h, w_head, w_tail, w_fc, b_fc)
    assert out.shape == (N, F_OUT)
    max_err = float(jnp.max(jnp.abs(out - ref)))
    assert jnp.allclose(out, ref, atol=2e-2, rtol=2e-2), f"mismatch vs reference (max err {max_err})"

    print("KERNEL_OK")
</pallas_src>

<mosaic_0001>
module attributes {stable_mosaic.version = 11 : i64} {
  func.func @gat_scores_kernel(%arg0: i32, %arg1: memref<128x128xf32, #tpu.memory_space<vmem>>, %arg2: memref<128x2xf32, #tpu.memory_space<vmem>>, %arg3: memref<128x2xf32, #tpu.memory_space<vmem>>) attributes {dimension_semantics = [#tpu.dimension_semantics<parallel>], iteration_bounds = array<i64: 2>, scalar_prefetch = 0 : i64, scratch_operands = 0 : i64, tpu.core_type = #tpu.core_type<tc>, window_params = [{transform_indices = @transform_0, window_bounds = array<i64: 128, 128>}, {pipeline_mode = #tpu.pipeline_mode<synchronous>, transform_indices = @transform_1, window_bounds = array<i64: 128, 2>}, {transform_indices = @transform_2, window_bounds = array<i64: 128, 2>}]} {
    %c0 = arith.constant 0 : index
    %c0_0 = arith.constant 0 : index
    %0 = vector.load %arg1[%c0, %c0_0] : memref<128x128xf32, #tpu.memory_space<vmem>>, vector<128x128xf32>
    %c0_1 = arith.constant 0 : index
    %c0_2 = arith.constant 0 : index
    %1 = vector.load %arg2[%c0_1, %c0_2] : memref<128x2xf32, #tpu.memory_space<vmem>>, vector<128x2xf32>
    %cst = arith.constant dense<0.000000e+00> : vector<128x2xf32>
    %2 = tpu.matmul %0, %1, %cst {dimension_numbers = #tpu.dot_dimension_numbers<[1], [0], [0], [1], [0, 0, 1, 1], [], []>} : vector<128x128xf32>, vector<128x2xf32>, vector<128x2xf32> -> vector<128x2xf32>
    %3 = math.tanh %2 : vector<128x2xf32>
    %c0_3 = arith.constant 0 : index
    %c0_4 = arith.constant 0 : index
    %4 = vector.load %arg3[%c0_3, %c0_4] : memref<128x2xf32, #tpu.memory_space<vmem>>, vector<128x2xf32>
    tpu.vector_store %arg3[%c0_3, %c0_4], %3 {strides = array<i32>} : memref<128x2xf32, #tpu.memory_space<vmem>>, vector<128x2xf32>,
    return
  }
  func.func @transform_0(%arg0: i32) -> (i32, i32) {
    %c0_i32 = arith.constant 0 : i32
    %c0_i32_0 = arith.constant 0 : i32
    return %arg0, %c0_i32 : i32, i32
  }
  func.func @transform_1(%arg0: i32) -> (i32, i32) {
    %c0_i32 = arith.constant 0 : i32
    %c0_i32_0 = arith.constant 0 : i32
    %c0_i32_1 = arith.constant 0 : i32
    return %c0_i32, %c0_i32_0 : i32, i32
  }
  func.func @transform_2(%arg0: i32) -> (i32, i32) {
    %c0_i32 = arith.constant 0 : i32
    %c0_i32_0 = arith.constant 0 : i32
    return %arg0, %c0_i32 : i32, i32
  }
}

</mosaic_0001>

<llo_original>
// kernel: tpu_custom_call.1
$region0: #{tpu_custom_call.1}
  #allocation0 [shape = 'u32[]', space=smem, size = 0x4, offset = 0x4, fixed_abs, tag = 'smem constant byte address 0x4 - core index']
  #allocation1 [shape = 'u32[72,128]{1,0:T(1,128)}', space=vmem, size = 0x9000, scoped, tag = 'internal scratch']
  %s0 = inlined_call_operand.hbm [shape: f32[256,128], index: 0, kind: input, shape index: {}]
  %s1 = inlined_call_operand.vmem [shape: f32[128,2], index: 1, kind: input, shape index: {}]
  %s2 = inlined_call_operand.vmem [shape: f32[256,2], index: 2, kind: output, shape index: {}]
  %s3 = sld [smem:[#allocation0]]
  $region45: #{tpu_custom_call.1} parent=0
    _
  %s5 = ssub.s32 1, %s3
  %s6 = scalar_select 0, %s5, %s3
  $region1: #{tpu_custom_call.1} parent=0
    #allocation2 [shape = 'u8[131072]{0}', space=vmem, size = 0x20000, scoped, tag = 'input window, operand 0']
    #allocation3 [shape = 's32[2]{0}', space=sflag, size = 0x8, scoped, tag = 'scoped memory for tpu_custom_call.1']
    %7 = vsyncpa [#allocation3], 0
    %s8 = scalar_lea.sflag [#allocation3], 1
    %9 = vsyncpa %s8, 0
    loop: start=0, step=1, limit=4
    $region2: #{tpu_custom_call.1} parent=1 // loop_pre_header
      _
    $region3: #{tpu_custom_call.1} parent=1 // loop_header
      %s11 = sphi 0, %s15
      %p12 = scmp.ge.s32.totalorder %s11, 4
      %s21 = sphi 0, %s23
      %s24 = sphi 0, %s21
      %s25 = sphi 0, %s24
      %s41 = sphi 0, %s25
      %s45 = sphi 0, %s45
      %s47 = sphi 0, %s45
      %s48 = sphi 0, %s47
      %s62 = sphi 0, %s48
      %s68 = sphi 0, %s70
      %s71 = sphi 0, %s68
      %s72 = sphi 0, %s71
      %s88 = sphi 0, %s72
    $region4: #{tpu_custom_call.1} parent=1 // loop_header_branch
      %14 = sbr.rel (%p12) target = $region8
    $region5: #{tpu_custom_call.1} parent=1 // loop_body
      %s16 = ssub.s32 %s11, 1
      %s17 = ssub.s32 %s11, 2
      %s18 = sadd.s32 %s11, 1
      %s19 = ssub.s32 %s11, %s18
      %p20 = scmp.eq.s32.totalorder %s19, 0
      %s22 = sadd.s32 %s21, 1
      %s23 = scalar_select %p20, %s21, %s22
      %p26 = pneg %p20
      %p27 = scmp.eq.s32.totalorder %s11, 1
      %p28 = por %p26, %p27
      %p29 = scmp.ne.s32.totalorder %s21, %s24
      %p30 = scmp.eq.s32.totalorder %s11, 0
      %p31 = por %p29, %p30
      %p32 = scmp.ne.s32.totalorder %s21, %s24
      %p33 = scmp.eq.s32.totalorder %s16, 1
      %p34 = por %p32, %p33
      %p35 = scmp.ne.s32.totalorder %s24, %s25
      %p36 = scmp.eq.s32.totalorder %s16, 0
      %p37 = por %p35, %p36
      %p38 = scmp.ne.s32.totalorder %s24, %s25
      %p39 = scmp.eq.s32.totalorder %s17, 1
      %p40 = por %p38, %p39
      %p42 = scmp.ne.s32.totalorder %s25, %s41
      %p43 = scmp.eq.s32.totalorder %s17, 0
      %p44 = por %p42, %p43
      %s46 = sadd.s32 %s45, 1
      %p49 = scmp.eq.s32.totalorder %s11, 1
      %p50 = scmp.ne.s32.totalorder %s45, %s47
      %p51 = scmp.eq.s32.totalorder %s11, 0
      %p52 = por %p50, %p51
      %p53 = scmp.ne.s32.totalorder %s45, %s47
      %p54 = scmp.eq.s32.totalorder %s16, 1
      %p55 = por %p53, %p54
      %p56 = scmp.ne.s32.totalorder %s47, %s48
      %p57 = scmp.eq.s32.totalorder %s16, 0
      %p58 = por %p56, %p57
      %p59 = scmp.ne.s32.totalorder %s47, %s48
      %p60 = scmp.eq.s32.totalorder %s17, 1
      %p61 = por %p59, %p60
      %p63 = scmp.ne.s32.totalorder %s48, %s62
      %p64 = scmp.eq.s32.totalorder %s17, 0
      %p65 = por %p63, %p64
      %s66 = ssub.s32 %s11, %s18
      %p67 = scmp.eq.s32.totalorder %s66, 0
      %s69 = sadd.s32 %s68, 1
      %s70 = scalar_select %p67, %s68, %s69
      %p73 = pneg %p67
      %p74 = scmp.eq.s32.totalorder %s11, 1
      %p75 = por %p73, %p74
      %p76 = scmp.ne.s32.totalorder %s68, %s71
      %p77 = scmp.eq.s32.totalorder %s11, 0
      %p78 = por %p76, %p77
      %p79 = scmp.ne.s32.totalorder %s68, %s71
      %p80 = scmp.eq.s32.totalorder %s16, 1
      %p81 = por %p79, %p80
      %p82 = scmp.ne.s32.totalorder %s71, %s72
      %p83 = scmp.eq.s32.totalorder %s16, 0
      %p84 = por %p82, %p83
      %p85 = scmp.ne.s32.totalorder %s71, %s72
      %p86 = scmp.eq.s32.totalorder %s17, 1
      %p87 = por %p85, %p86
      %p89 = scmp.ne.s32.totalorder %s72, %s88
      %p90 = scmp.eq.s32.totalorder %s17, 0
      %p91 = por %p89, %p90
      %p92 = scmp.le.s32.totalorder 1, %s11
      %p93 = scmp.lt.s32.totalorder %s11, 3
      %p94 = pnand %p92, %p93
      %p95 = pneg %p94
      // Predicated region
      $region9: #{tpu_custom_call.1} parent=5 // pred_check
        _
      $region10: #{tpu_custom_call.1} parent=5 // pred_check_branch
        %97 = sbr.rel (%p94) target = $region12
      $region11: #{tpu_custom_call.1} parent=5 // pred_region
        %s98 = ssub.s32 %s11, 1
        // Predicated region
        $region13: #{tpu_custom_call.1} parent=11 // pred_check
          %p99 = pneg %p58
        $region14: #{tpu_custom_call.1} parent=11 // pred_check_branch
          %101 = sbr.rel (%p99) target = $region16
        $region15: #{tpu_custom_call.1} parent=11 // pred_region
          _
        $region16: #{tpu_custom_call.1} parent=11 // pred_fallthru
          _
      $region12: #{tpu_custom_call.1} parent=5 // pred_fallthru
        _
      %p102 = scmp.lt.s32.totalorder %s11, 2
      // Predicated region
      $region17: #{tpu_custom_call.1} parent=5 // pred_check
        %p103 = pneg %p102
      $region18: #{tpu_custom_call.1} parent=5 // pred_check_branch
        %105 = sbr.rel (%p103) target = $region20
      $region19: #{tpu_custom_call.1} parent=5 // pred_region
        // Predicated region
        $region21: #{tpu_custom_call.1} parent=19 // pred_check
          %p106 = pneg %p31
        $region22: #{tpu_custom_call.1} parent=19 // pred_check_branch
          %108 = sbr.rel (%p106) target = $region24
        $region23: #{tpu_custom_call.1} parent=19 // pred_region
          %s109 = sand.u32 %s21, 1
          %s110 = scalar_lea.sflag [#allocation3], %s109
          %s111 = sand.u32 %s21, 1
          %s112 = smul.addr %s111, 128
          %s113 = scalar_lea.vmem [#allocation2], %s112
          %s114 = smul.u32 16, %s11
          %116 = vsyncadd %s110, 0
          %s117 = smul.addr %s114, 8
          %s118 = scalar_lea.hbm %s0, %s117
          %s119 = sshll.u32 %s118, 4
          %s120 = int_to_ptr.hbm [resolvable:$true] %s119
          %s121 = sshll.u32 %s113, 4
          %s122 = int_to_ptr.vmem [resolvable:$true] %s121
          %127 = dma.hbm_to_vmem [thread:$0]  %s120, 2048, %s122, %s110, 128, 128, 8
        $region24: #{tpu_custom_call.1} parent=19 // pred_fallthru
          _
      $region20: #{tpu_custom_call.1} parent=5 // pred_fallthru
        _
      %p128 = scmp.le.s32.totalorder 1, %s11
      %p129 = scmp.lt.s32.totalorder %s11, 3
      %p130 = pnand %p128, %p129
      %p131 = pneg %p130
      // Predicated region
      $region25: #{tpu_custom_call.1} parent=5 // pred_check
        _
      $region26: #{tpu_custom_call.1} parent=5 // pred_check_branch
        %133 = sbr.rel (%p130) target = $region28
      $region27: #{tpu_custom_call.1} parent=5 // pred_region
        %s134 = ssub.s32 %s11, 1
        %s135 = sand.u32 %s24, 1
        %s136 = scalar_lea.sflag [#allocation3], %s135
        %s137 = sand.u32 %s24, 1
        %s138 = smul.addr %s137, 128
        %s139 = scalar_lea.vmem [#allocation2], %s138
        // Predicated region
        $region29: #{tpu_custom_call.1} parent=27 // pred_check
          %p140 = pneg %p37
        $region30: #{tpu_custom_call.1} parent=27 // pred_check_branch
          %142 = sbr.rel (%p140) target = $region32
        $region31: #{tpu_custom_call.1} parent=27 // pred_region
          %144 = dma.done %s136, 2048
        $region32: #{tpu_custom_call.1} parent=27 // pred_fallthru
          _
        %s145 = sand.u32 %s24, 1
        %s146 = scalar_lea.sflag [#allocation3], %s145
        %s147 = sand.u32 %s24, 1
        %s148 = smul.addr %s147, 128
        %s149 = scalar_lea.vmem [#allocation2], %s148
        %p150 = pneg %p37
        %p151 = pneg %p34
        %p152 = pneg %p58
        %p153 = pneg %p55
        %p154 = pneg %p84
        %p155 = pneg %p81
        %s156 = smul.u32 16, %s16
        %p157 = scmp.lt.s32.totalorder %s156, 31
        %s158 = scalar_select %p157, %s156, 31
        %s159 = smul.addr %s158, 8
        %s160 = scalar_lea.vmem %s2, %s159
        %s161 = smul.u32 16, %s16
        %s162 = smul.u32 16, %s16
        %p163 = scmp.lt.s32.totalorder %s162, 31
        %s164 = scalar_select %p163, %s162, 31
        %s165 = smul.addr %s164, 8
        %s166 = scalar_lea.vmem %s2, %s165
        %s167 = smul.u32 16, %s16
        %v168 = vld [vmem:[%s139] sm:$0xff]
        %v169 = vld [vmem:[%s139 + $0x8] sm:$0xff]
        %v170 = vld [vmem:[%s139 + $0x10] sm:$0xff]
        %v171 = vld [vmem:[%s139 + $0x18] sm:$0xff]
        %v172 = vld [vmem:[%s139 + $0x20] sm:$0xff]
        %v173 = vld [vmem:[%s139 + $0x28] sm:$0xff]
        %v174 = vld [vmem:[%s139 + $0x30] sm:$0xff]
        %v175 = vld [vmem:[%s139 + $0x38] sm:$0xff]
        %v176 = vld [vmem:[%s139 + $0x40] sm:$0xff]
        %v177 = vld [vmem:[%s139 + $0x48] sm:$0xff]
        %v178 = vld [vmem:[%s139 + $0x50] sm:$0xff]
        %v179 = vld [vmem:[%s139 + $0x58] sm:$0xff]
        %v180 = vld [vmem:[%s139 + $0x60] sm:$0xff]
        %v181 = vld [vmem:[%s139 + $0x68] sm:$0xff]
        %v182 = vld [vmem:[%s139 + $0x70] sm:$0xff]
        %v183 = vld [vmem:[%s139 + $0x78] sm:$0xff]
        %v184 = vld [vmem:[%s1] sm:$0xff]
        %v185 = vld [vmem:[%s1 + $0x8] sm:$0xff]
        %v186 = vld [vmem:[%s1 + $0x10] sm:$0xff]
        %v187 = vld [vmem:[%s1 + $0x18] sm:$0xff]
        %v188 = vld [vmem:[%s1 + $0x20] sm:$0xff]
        %v189 = vld [vmem:[%s1 + $0x28] sm:$0xff]
        %v190 = vld [vmem:[%s1 + $0x30] sm:$0xff]
        %v191 = vld [vmem:[%s1 + $0x38] sm:$0xff]
        %v192 = vld [vmem:[%s1 + $0x40] sm:$0xff]
        %v193 = vld [vmem:[%s1 + $0x48] sm:$0xff]
        %v194 = vld [vmem:[%s1 + $0x50] sm:$0xff]
        %v195 = vld [vmem:[%s1 + $0x58] sm:$0xff]
        %v196 = vld [vmem:[%s1 + $0x60] sm:$0xff]
        %v197 = vld [vmem:[%s1 + $0x68] sm:$0xff]
        %v198 = vld [vmem:[%s1 + $0x70] sm:$0xff]
        %v199 = vld [vmem:[%s1 + $0x78] sm:$0xff]
        %200 = vmatpush.msra.mxu0 %v199
        %201 = vmatpush.msra.mxu0 %v198
        %202 = vmatpush.msra.mxu0 %v197
        %203 = vmatpush.msra.mxu0 %v196
        %204 = vmatpush.msra.mxu0 %v195
        %205 = vmatpush.msra.mxu0 %v194
        %206 = vmatpush.msra.mxu0 %v193
        %207 = vmatpush.msra.mxu0 %v192
        %208 = vmatpush.msra.mxu0 %v191
        %209 = vmatpush.msra.mxu0 %v190
        %210 = vmatpush.msra.mxu0 %v189
        %211 = vmatpush.msra.mxu0 %v188
        %212 = vmatpush.msra.mxu0 %v187
        %213 = vmatpush.msra.mxu0 %v186
        %214 = vmatpush.msra.mxu0 %v185
        %215 = vmatpush.msra.mxu0 %v184
        %216 = vmatmul.f32.gmra.mxu0 %v168
        %v217 = vpop.f32.mrf.mxu0
        %v218 = vadd.f32 0.0, %v217
        %219 = vmatmul.f32.gmra.mxu0 %v169
        %v220 = vpop.f32.mrf.mxu0
        %v221 = vadd.f32 0.0, %v220
        %222 = vmatmul.f32.gmra.mxu0 %v170
        %v223 = vpop.f32.mrf.mxu0
        %v224 = vadd.f32 0.0, %v223
        %225 = vmatmul.f32.gmra.mxu0 %v171
        %v226 = vpop.f32.mrf.mxu0
        %v227 = vadd.f32 0.0, %v226
        %228 = vmatmul.f32.gmra.mxu0 %v172
        %v229 = vpop.f32.mrf.mxu0
        %v230 = vadd.f32 0.0, %v229
        %231 = vmatmul.f32.gmra.mxu0 %v173
        %v232 = vpop.f32.mrf.mxu0
        %v233 = vadd.f32 0.0, %v232
        %234 = vmatmul.f32.gmra.mxu0 %v174
        %v235 = vpop.f32.mrf.mxu0
        %v236 = vadd.f32 0.0, %v235
        %237 = vmatmul.f32.gmra.mxu0 %v175
        %v238 = vpop.f32.mrf.mxu0
        %v239 = vadd.f32 0.0, %v238
        %240 = vmatmul.f32.gmra.mxu0 %v176
        %v241 = vpop.f32.mrf.mxu0
        %v242 = vadd.f32 0.0, %v241
        %243 = vmatmul.f32.gmra.mxu0 %v177
        %v244 = vpop.f32.mrf.mxu0
        %v245 = vadd.f32 0.0, %v244
        %246 = vmatmul.f32.gmra.mxu0 %v178
        %v247 = vpop.f32.mrf.mxu0
        %v248 = vadd.f32 0.0, %v247
        %249 = vmatmul.f32.gmra.mxu0 %v179
        %v250 = vpop.f32.mrf.mxu0
        %v251 = vadd.f32 0.0, %v250
        %252 = vmatmul.f32.gmra.mxu0 %v180
        %v253 = vpop.f32.mrf.mxu0
        %v254 = vadd.f32 0.0, %v253
        %255 = vmatmul.f32.gmra.mxu0 %v181
        %v256 = vpop.f32.mrf.mxu0
        %v257 = vadd.f32 0.0, %v256
        %258 = vmatmul.f32.gmra.mxu0 %v182
        %v259 = vpop.f32.mrf.mxu0
        %v260 = vadd.f32 0.0, %v259
        %261 = vmatmul.f32.gmra.mxu0 %v183
        %v262 = vpop.f32.mrf.mxu0
        %v263 = vadd.f32 0.0, %v262
        %264 = vdwg.mxu0
        %v265 = vtanh.pop %v218
        %v266 = vtanh.pop %v221
        %v267 = vtanh.pop %v224
        %v268 = vtanh.pop %v227
        %v269 = vtanh.pop %v230
        %v270 = vtanh.pop %v233
        %v271 = vtanh.pop %v236
        %v272 = vtanh.pop %v239
        %v273 = vtanh.pop %v242
        %v274 = vtanh.pop %v245
        %v275 = vtanh.pop %v248
        %v276 = vtanh.pop %v251
        %v277 = vtanh.pop %v254
        %v278 = vtanh.pop %v257
        %v279 = vtanh.pop %v260
        %v280 = vtanh.pop %v263
        %vm281 = vcmask 15360
        %282 = vst.msk [vmem:[%s166] sm:$0xff] %vm281, %v265
        %283 = vst.msk [vmem:[%s166 + $0x8] sm:$0xff] %vm281, %v266
        %284 = vst.msk [vmem:[%s166 + $0x10] sm:$0xff] %vm281, %v267
        %285 = vst.msk [vmem:[%s166 + $0x18] sm:$0xff] %vm281, %v268
        %286 = vst.msk [vmem:[%s166 + $0x20] sm:$0xff] %vm281, %v269
        %287 = vst.msk [vmem:[%s166 + $0x28] sm:$0xff] %vm281, %v270
        %288 = vst.msk [vmem:[%s166 + $0x30] sm:$0xff] %vm281, %v271
        %289 = vst.msk [vmem:[%s166 + $0x38] sm:$0xff] %vm281, %v272
        %290 = vst.msk [vmem:[%s166 + $0x40] sm:$0xff] %vm281, %v273
        %291 = vst.msk [vmem:[%s166 + $0x48] sm:$0xff] %vm281, %v274
        %292 = vst.msk [vmem:[%s166 + $0x50] sm:$0xff] %vm281, %v275
        %293 = vst.msk [vmem:[%s166 + $0x58] sm:$0xff] %vm281, %v276
        %294 = vst.msk [vmem:[%s166 + $0x60] sm:$0xff] %vm281, %v277
        %295 = vst.msk [vmem:[%s166 + $0x68] sm:$0xff] %vm281, %v278
        %296 = vst.msk [vmem:[%s166 + $0x70] sm:$0xff] %vm281, %v279
        %297 = vst.msk [vmem:[%s166 + $0x78] sm:$0xff] %vm281, %v280
        %s298 = smul.u32 16, %s16
        %p299 = scmp.lt.s32.totalorder %s298, 31
        %s300 = scalar_select %p299, %s298, 31
        %s301 = smul.addr %s300, 8
        %s302 = scalar_lea.vmem %s2, %s301
        // Predicated region
        $region33: #{tpu_custom_call.1} parent=27 // pred_check
          %p303 = pneg %p81
        $region34: #{tpu_custom_call.1} parent=27 // pred_check_branch
          %305 = sbr.rel (%p303) target = $region36
        $region35: #{tpu_custom_call.1} parent=27 // pred_region
          %s306 = smul.u32 16, %s16
        $region36: #{tpu_custom_call.1} parent=27 // pred_fallthru
          _
      $region28: #{tpu_custom_call.1} parent=5 // pred_fallthru
        _
      %p307 = scmp.le.s32.totalorder 2, %s11
      // Predicated region
      $region37: #{tpu_custom_call.1} parent=5 // pred_check
        %p308 = pneg %p307
      $region38: #{tpu_custom_call.1} parent=5 // pred_check_branch
        %310 = sbr.rel (%p308) target = $region40
      $region39: #{tpu_custom_call.1} parent=5 // pred_region
        %s311 = ssub.s32 %s11, 2
        // Predicated region
        $region41: #{tpu_custom_call.1} parent=39 // pred_check
          %p312 = pneg %p87
        $region42: #{tpu_custom_call.1} parent=39 // pred_check_branch
          %314 = sbr.rel (%p312) target = $region44
        $region43: #{tpu_custom_call.1} parent=39 // pred_region
          %s315 = smul.u32 16, %s17
          %p316 = scmp.lt.s32.totalorder %s315, 31
          %s317 = scalar_select %p316, %s315, 31
          %s318 = smul.addr %s317, 8
          %s319 = scalar_lea.vmem %s2, %s318
        $region44: #{tpu_custom_call.1} parent=39 // pred_fallthru
          _
      $region40: #{tpu_custom_call.1} parent=5 // pred_fallthru
        _
    $region6: #{tpu_custom_call.1} parent=1 // loop_footer
      %s15 = sadd.s32 1, %s11
    $region7: #{tpu_custom_call.1} parent=1 // loop_footer_branch
      %10 = sbr.rel target = $region3
    $region8: #{tpu_custom_call.1} parent=1 // loop_exit
      _
    %320 = vsyncpa [#allocation3], 1
    %s321 = scalar_lea.sflag [#allocation3], 1
    %322 = vsyncpa %s321, 1

</llo_original>
